<compile_context>
chip_gen: v7x
topology: tpu7x:2x2x1
jax: 0.10.0
libtpu: 0.0.40
codegen_flags: <defaults>
</compile_context>

<pallas_src>
import functools
import itertools

import numpy as np
import jax
import jax.numpy as jnp
from jax import lax
from jax.experimental import pallas as pl
from jax.experimental.pallas import tpu as pltpu

BETA = 0.6

# Conservative VMEM budgets (sized against v5e's 16 MiB default scoped VMEM; leaves
# ample headroom on v6e/v7x).
_LOG_ALPHA_SINGLE_BLOCK_MAX_N = 512             # (n,n) f32 block <= 1 MiB per buffer
_GATHER_FAST_PATH_MAX_BYTES = 2 * 1024 * 1024   # x payload; x4 for in/out dbl-buffer


def _round_up(a: int, b: int) -> int:
    return (a + b - 1) // b * b


# ---------------------------------------------------------------------------
# Kernel 1: log_alpha = uniform_noise + beta on the diagonal (tiled elementwise)
# ---------------------------------------------------------------------------
def _log_alpha_kernel(noise_ref, out_ref, *, beta: float, tm: int, tn: int):
    i = pl.program_id(0)
    j = pl.program_id(1)
    shape = out_ref.shape
    rows = lax.broadcasted_iota(jnp.int32, shape, 0) + i * tm
    cols = lax.broadcasted_iota(jnp.int32, shape, 1) + j * tn
    u = noise_ref[...]
    out_ref[...] = jnp.where(rows == cols, u + jnp.float32(beta), u)


def make_log_alpha(n: int, key: jax.Array, beta: float = BETA) -> jax.Array:
    """Returns a (R, C) device array with R, C >= n; caller trims [:n, :n] on host."""
    if n <= _LOG_ALPHA_SINGLE_BLOCK_MAX_N:
        # Exact full-array block: (8,128) tiling rule is waived when block == full
        # array dims, so no padding and no device-side slice.
        tm, tn = n, n
        R, C = n, n
    else:
        tm = 256
        tn = min(_round_up(n, 128), 1024)
        R = _round_up(n, tm)
        C = _round_up(n, tn)
    noise = jax.random.uniform(key, (R, C), dtype=jnp.float32)
    kern = functools.partial(_log_alpha_kernel, beta=beta, tm=tm, tn=tn)
    return pl.pallas_call(
        kern,
        out_shape=jax.ShapeDtypeStruct((R, C), jnp.float32),
        grid=(R // tm, C // tn),
        in_specs=[pl.BlockSpec((tm, tn), lambda i, j: (i, j))],
        out_specs=pl.BlockSpec((tm, tn), lambda i, j: (i, j)),
        compiler_params=pltpu.CompilerParams(
            dimension_semantics=("parallel", "parallel")),
    )(noise)


# ---------------------------------------------------------------------------
# Host: exact linear sum assignment (maximize).  row i -> column perm[i]
# TODO(synk): Hungarian / linear_sum_assignment has no clean Pallas equivalent;
#             the O(n^3) solve stays on host (the original also calls scipy on CPU).
# ---------------------------------------------------------------------------
def _solve_assignment_max(score: np.ndarray) -> np.ndarray:
    score = np.asarray(score, dtype=np.float64)
    n = score.shape[0]
    try:
        from scipy.optimize import linear_sum_assignment  # type: ignore

        row, col = linear_sum_assignment(-score)
        perm = np.empty(n, dtype=np.int32)
        perm[row] = col
        return perm
    except Exception:
        # Exact brute-force fallback (fine for the small n used here).
        best, best_p = -np.inf, None
        for p in itertools.permutations(range(n)):
            s = score[np.arange(n), list(p)].sum()
            if s > best:
                best, best_p = s, p
        return np.asarray(best_p, dtype=np.int32)


# ---------------------------------------------------------------------------
# Kernel 2: gather rows x[perm]
# ---------------------------------------------------------------------------
def _gather_fast_kernel(perm_ref, x_ref, o_ref, *, unroll):
    # Whole slab resident in VMEM: copy rows according to the SMEM permutation.
    n = o_ref.shape[0]

    def body(i, carry):
        src = perm_ref[i]
        o_ref[pl.ds(i, 1), :] = x_ref[pl.ds(src, 1), :]
        return carry

    lax.fori_loop(0, n, body, 0, unroll=unroll)


def _gather_rows_kernel(perm_ref, x_ref, o_ref):
    del perm_ref  # consumed by the index_maps
    o_ref[...] = x_ref[...]


def permute_rows(x: jax.Array, perm: jax.Array) -> jax.Array:
    n = x.shape[0]
    feat = int(np.prod(x.shape[1:])) if x.ndim > 1 else 1
    x2 = x.reshape(n, feat)
    perm = perm.astype(jnp.int32)
    itemsize = x2.dtype.itemsize

    if n * feat * itemsize <= _GATHER_FAST_PATH_MAX_BYTES:
        # Fast path: one grid step, one DMA in + one DMA out, no padding/slicing.
        kern = functools.partial(_gather_fast_kernel, unroll=(n <= 64))
        out2 = pl.pallas_call(
            kern,
            out_shape=jax.ShapeDtypeStruct((n, feat), x.dtype),
            grid_spec=pltpu.PrefetchScalarGridSpec(
                num_scalar_prefetch=1,
                grid=(1,),
                in_specs=[pl.BlockSpec((n, feat), lambda i, perm_ref: (0, 0))],
                out_specs=pl.BlockSpec((n, feat), lambda i, perm_ref: (0, 0)),
            ),
        )(perm, x2)
        return out2.reshape(x.shape)

    # Large-x path: per-row BlockSpec gather via scalar-prefetched index_map,
    # deeper input pipeline to hide per-row DMA latency, both TCs on v7x.
    fpad = _round_up(max(feat, 128), 128)
    if fpad != feat:
        # TODO(synk): a memory_space=pl.ANY + per-row make_async_copy variant would
        # avoid this pad/slice HBM round trip for non-128-aligned feature sizes.
        x2 = jnp.pad(x2, ((0, 0), (0, fpad - feat)))
    r = fpad // 128
    x3 = x2.reshape(n, r, 128)
    out3 = pl.pallas_call(
        _gather_rows_kernel,
        out_shape=jax.ShapeDtypeStruct((n, r, 128), x.dtype),
        grid_spec=pltpu.PrefetchScalarGridSpec(
            num_scalar_prefetch=1,
            grid=(n,),
            in_specs=[pl.BlockSpec((1, r, 128),
                                   lambda i, perm_ref: (perm_ref[i], 0, 0),
                                   pipeline_mode=pl.Buffered(3))],
            out_specs=pl.BlockSpec((1, r, 128), lambda i, perm_ref: (i, 0, 0)),
        ),
        compiler_params=pltpu.CompilerParams(dimension_semantics=("parallel",)),
    )(perm, x3)
    out2 = out3.reshape(n, fpad)
    if fpad != feat:
        out2 = out2[:, :feat]
    return out2.reshape(x.shape)


# ---------------------------------------------------------------------------
# Module wrapper
# ---------------------------------------------------------------------------
class OrderRandPermutation:
    """JAX/Pallas port of the PyTorch OrderRandPermutation module."""

    def __init__(self, beta: float = 0.6, key: jax.Array | None = None):
        self.beta = beta
        # Stateful key mirrors torch's global RNG: fresh noise on every call.
        self._key = key if key is not None else jax.random.PRNGKey(42)

    def __call__(self, x: jax.Array, key: jax.Array | None = None) -> jax.Array:
        n = x.shape[0]
        if key is None:
            self._key, key = jax.random.split(self._key)
        log_alpha_pad = make_log_alpha(n, key, self.beta)           # Pallas kernel 1
        log_alpha = np.asarray(jax.device_get(log_alpha_pad))[:n, :n]  # trim on host
        perm = _solve_assignment_max(log_alpha)                     # host LSA solve
        return permute_rows(x, jnp.asarray(perm))                   # Pallas kernel 2


if __name__ == "__main__":
    key = jax.random.PRNGKey(0)
    # small NCHW-style input; the permutation acts on the batch axis (n = 8)
    x = jax.random.normal(key, (8, 4, 16, 16), dtype=jnp.float32)

    mod = OrderRandPermutation(beta=0.6)
    y = mod(x)
    y = jax.block_until_ready(y)

    assert y.shape == x.shape and y.dtype == x.dtype
    # sanity check: output rows are exactly a permutation of input rows
    xn = np.asarray(x).reshape(x.shape[0], -1)
    yn = np.asarray(y).reshape(y.shape[0], -1)
    matched = [int(np.argmin(np.abs(xn - yn[i]).sum(-1))) for i in range(y.shape[0])]
    assert sorted(matched) == list(range(x.shape[0]))
    assert np.allclose(xn[np.asarray(matched)], yn)

    print("KERNEL_OK")
</pallas_src>

<mosaic_0001>
module attributes {stable_mosaic.version = 11 : i64} {
  func.func @_log_alpha_kernel(%arg0: i32, %arg1: i32, %arg2: memref<8x8xf32, #tpu.memory_space<vmem>>, %arg3: memref<8x8xf32, #tpu.memory_space<vmem>>) attributes {dimension_semantics = [#tpu.dimension_semantics<parallel>, #tpu.dimension_semantics<parallel>], iteration_bounds = array<i64: 1, 1>, scalar_prefetch = 0 : i64, scratch_operands = 0 : i64, tpu.core_type = #tpu.core_type<tc>, window_params = [{transform_indices = @transform_0, window_bounds = array<i64: 8, 8>}, {transform_indices = @transform_1, window_bounds = array<i64: 8, 8>}]} {
    %0 = tpu.iota {dimensions = array<i32: 0>} : vector<8x8xi32>
    %c8_i32 = arith.constant 8 : i32
    %1 = arith.muli %arg0, %c8_i32 : i32
    %2 = vector.broadcast %1 : i32 to vector<8x8xi32>
    %3 = arith.addi %0, %2 : vector<8x8xi32>
    %4 = tpu.iota {dimensions = array<i32: 1>} : vector<8x8xi32>
    %c8_i32_0 = arith.constant 8 : i32
    %5 = arith.muli %arg1, %c8_i32_0 : i32
    %6 = vector.broadcast %5 : i32 to vector<8x8xi32>
    %7 = arith.addi %4, %6 : vector<8x8xi32>
    %c0 = arith.constant 0 : index
    %c0_1 = arith.constant 0 : index
    %8 = vector.load %arg2[%c0, %c0_1] : memref<8x8xf32, #tpu.memory_space<vmem>>, vector<8x8xf32>
    %9 = arith.cmpi eq, %3, %7 : vector<8x8xi32>
    %cst = arith.constant 6.000000e-01 : f32
    %10 = vector.broadcast %cst : f32 to vector<8x8xf32>
    %11 = arith.addf %8, %10 : vector<8x8xf32>
    %12 = arith.select %9, %11, %8 : vector<8x8xi1>, vector<8x8xf32>
    %c0_2 = arith.constant 0 : index
    %c0_3 = arith.constant 0 : index
    %13 = vector.load %arg3[%c0_2, %c0_3] : memref<8x8xf32, #tpu.memory_space<vmem>>, vector<8x8xf32>
    tpu.vector_store %arg3[%c0_2, %c0_3], %12 {strides = array<i32>} : memref<8x8xf32, #tpu.memory_space<vmem>>, vector<8x8xf32>,
    return
  }
  func.func @transform_0(%arg0: i32, %arg1: i32) -> (i32, i32) {
    %c0_i32 = arith.constant 0 : i32
    return %arg0, %arg1 : i32, i32
  }
  func.func @transform_1(%arg0: i32, %arg1: i32) -> (i32, i32) {
    %c0_i32 = arith.constant 0 : i32
    return %arg0, %arg1 : i32, i32
  }
}

</mosaic_0001>

<llo_original>
// kernel: tpu_custom_call.1
$region0: #{tpu_custom_call.1}
  #allocation0 [shape = 'u32[]', space=smem, size = 0x4, offset = 0x4, fixed_abs, tag = 'smem constant byte address 0x4 - core index']
  #allocation1 [shape = 'u32[144,128]{1,0:T(1,128)}', space=vmem, size = 0x12000, scoped, tag = 'internal scratch']
  %s0 = inlined_call_operand.hbm [shape: f32[8,8], index: 0, kind: input, shape index: {}]
  %s1 = inlined_call_operand.hbm [shape: f32[8,8], index: 1, kind: output, shape index: {}]
  %s2 = sld [smem:[#allocation0]]
  $region18: #{tpu_custom_call.1} parent=0
    _
  %s4 = ssub.s32 1, %s2
  %s5 = scalar_select 0, %s4, %s2
  $region1: #{tpu_custom_call.1} parent=0
    #allocation2 [shape = 'u8[4096]{0}', space=vmem, size = 0x1000, scoped, tag = 'input window, operand 0, single buffered']
    #allocation3 [shape = 's32[1]{0}', space=sflag, size = 0x4, scoped, tag = 'scoped memory for tpu_custom_call.1']
    #allocation4 [shape = 's32[1]{0}', space=sflag, size = 0x4, scoped, tag = 'scoped memory for tpu_custom_call.1']
    #allocation5 [shape = 'u8[4096]{0}', space=vmem, size = 0x1000, scoped, tag = 'output window, operand 0, single buffered']
    %6 = vsyncpa [#allocation3], 0
    %7 = vsyncpa [#allocation4], 0
    // Predicated region
    $region2: #{tpu_custom_call.1} parent=1 // pred_check
      _
    $region3: #{tpu_custom_call.1} parent=1 // pred_check_branch
      %9 = sbr.rel (0) target = $region5
    $region4: #{tpu_custom_call.1} parent=1 // pred_region
      %s11 = ssub.s32 128, 128
      %12 = vsyncadd [#allocation3], %s11
      %s14 = sshll.u32 [#allocation2], 4
      %s15 = int_to_ptr.vmem [resolvable:$true] %s14
      %17 = dma.hbm_to_vmem [thread:$0]  %s0, 128, %s15, [#allocation3]
    $region5: #{tpu_custom_call.1} parent=1 // pred_fallthru
      _
    // Predicated region
    $region6: #{tpu_custom_call.1} parent=1 // pred_check
      _
    $region7: #{tpu_custom_call.1} parent=1 // pred_check_branch
      %19 = sbr.rel (0) target = $region9
    $region8: #{tpu_custom_call.1} parent=1 // pred_region
      %20 = dma.done [#allocation3], 128
    $region9: #{tpu_custom_call.1} parent=1 // pred_fallthru
      _
    %v21 = vlaneseq
    %v22 = vshrl.u32 %v21, 7
    %s23 = smul.u32 0, 8
    %v24 = vstv %s23
    %v25 = vadd.s32 %v22, %v24
    %v26 = vlaneseq
    %v27 = vand.u32 %v26, 127
    %s28 = smul.u32 0, 8
    %v29 = vstv %s28
    %v30 = vadd.s32 %v27, %v29
    %v31 = vld [vmem:[#allocation2] sm:$0xff]
    %vm32 = vcmp.eq.s32.totalorder %v25, %v30
    %v33 = vadd.f32 %v31, 0.6
    %v34 = vsel %vm32, %v33, %v31
    %vm35 = vcmask 64512
    %36 = vst.msk [vmem:[#allocation5] sm:$0xff] %vm35, %v34
    // Predicated region
    $region10: #{tpu_custom_call.1} parent=1 // pred_check
      _
    $region11: #{tpu_custom_call.1} parent=1 // pred_check_branch
      %38 = sbr.rel (0) target = $region13
    $region12: #{tpu_custom_call.1} parent=1 // pred_region
      %s40 = ssub.s32 128, 128
      %41 = vsyncadd [#allocation4], %s40
      %s43 = sshll.u32 [#allocation5], 4
      %s44 = int_to_ptr.vmem [resolvable:$true] %s43
      %46 = dma.vmem_to_hbm [thread:$0]  %s44, 128, %s1, [#allocation4]
    $region13: #{tpu_custom_call.1} parent=1 // pred_fallthru
      _
    // Predicated region
    $region14: #{tpu_custom_call.1} parent=1 // pred_check
      _
    $region15: #{tpu_custom_call.1} parent=1 // pred_check_branch
      %48 = sbr.rel (0) target = $region17
    $region16: #{tpu_custom_call.1} parent=1 // pred_region
      %49 = dma.done [#allocation4], 128
    $region17: #{tpu_custom_call.1} parent=1 // pred_fallthru
      _
    %50 = vsyncpa [#allocation3], 1
    %51 = vsyncpa [#allocation4], 1

</llo_original>
